<compile_context>
chip_gen: v5e
topology: v5e:2x2
jax: 0.10.0
libtpu: 0.0.40
codegen_flags: <defaults>
</compile_context>

<pallas_src>
import jax
import jax.numpy as jnp
from jax.experimental import pallas as pl
from jax.experimental.pallas import tpu as pltpu

HIDDEN = 100        # fixed by the module definition
LANE = 128          # TPU lane width
SUBLANE = 8         # TPU sublane width (f32)


def _round_up(n, m):
    return ((n + m - 1) // m) * m


def _critic_kernel(x_ref, w1_ref, b1_ref, w2_ref, b2_ref, q_ref):
    """Fused MLP: Q = ReLU(x @ W1 + b1) @ W2 + b2 on one lane-dense VMEM tile."""
    # Layer 1: MXU matmul + bias + ReLU (VPU). Hidden dim padded to 128 lanes.
    h = jnp.dot(x_ref[...], w1_ref[...], preferred_element_type=jnp.float32)
    h = jnp.maximum(h + b1_ref[...], 0.0)
    # Layer 2: MXU matmul + bias. Output dim padded to 128 lanes -> unmasked vst.
    q = jnp.dot(h, w2_ref[...], preferred_element_type=jnp.float32)
    q_ref[...] = (q + b2_ref[...]).astype(q_ref.dtype)


def critic_net_forward(x, w1, b1, w2, b2, *, tb_max=512):
    """Pallas CriticNet forward.

    x:  (B, d_in) f32
    w1: (d_in, 100) f32, b1: (100,) f32
    w2: (100, d_out) f32, b2: (d_out,) f32
    returns (B, d_out) f32
    """
    B, d_in = x.shape
    d_out = w2.shape[1]

    h_pad = _round_up(HIDDEN, LANE)          # 100 -> 128
    o_pad = _round_up(max(d_out, 1), LANE)   # e.g. 1 -> 128 (lane-dense output)

    # Zero-pad parameters to lane-dense shapes (zeros guarantee padded lanes
    # contribute nothing to the real outputs).
    w1_p = jnp.zeros((d_in, h_pad), jnp.float32).at[:, :HIDDEN].set(w1)
    b1_p = jnp.zeros((1, h_pad), jnp.float32).at[0, :HIDDEN].set(b1)
    w2_p = jnp.zeros((h_pad, o_pad), jnp.float32).at[:HIDDEN, :d_out].set(w2)
    b2_p = jnp.zeros((1, o_pad), jnp.float32).at[0, :d_out].set(b2)

    # Batch tile: multiple of the sublane width, capped so a double-buffered
    # (TB, 128) f32 output tile stays well inside the v7x 64 MiB VMEM budget.
    TB = min(_round_up(tb_max, SUBLANE), _round_up(B, SUBLANE))
    B_pad = _round_up(B, TB)
    if B_pad != B:
        x_p = jnp.zeros((B_pad, d_in), x.dtype).at[:B].set(x)
    else:
        x_p = x

    grid = (B_pad // TB,)

    # NOTE: for production PPO batches, feed x/w1/w2 as bfloat16 (keep the
    # f32 preferred_element_type on the dots) to halve HBM traffic and use the
    # MXU's native bf16 path; f32 is kept here to match the PyTorch module.
    out = pl.pallas_call(
        _critic_kernel,
        out_shape=jax.ShapeDtypeStruct((B_pad, o_pad), jnp.float32),
        grid=grid,
        in_specs=[
            pl.BlockSpec((TB, d_in), lambda i: (i, 0)),      # batch-tiled x
            pl.BlockSpec((d_in, h_pad), lambda i: (0, 0)),   # resident weights
            pl.BlockSpec((1, h_pad), lambda i: (0, 0)),
            pl.BlockSpec((h_pad, o_pad), lambda i: (0, 0)),
            pl.BlockSpec((1, o_pad), lambda i: (0, 0)),
        ],
        out_specs=pl.BlockSpec((TB, o_pad), lambda i: (i, 0)),
        compiler_params=pltpu.CompilerParams(
            dimension_semantics=("parallel",),
        ),
    )(x_p, w1_p, b1_p, w2_p, b2_p)

    # Slice padded batch rows / padded output lanes back off.
    return out[:B, :d_out]


def init_critic_params(key, d_in, d_out):
    """Matches the module's __init__: weights ~ N(0, 0.1); biases keep
    nn.Linear's default U(-1/sqrt(fan_in), 1/sqrt(fan_in))."""
    k1, k2, k3, k4 = jax.random.split(key, 4)
    w1 = 0.1 * jax.random.normal(k1, (d_in, HIDDEN), dtype=jnp.float32)
    w2 = 0.1 * jax.random.normal(k2, (HIDDEN, d_out), dtype=jnp.float32)
    bound1 = 1.0 / jnp.sqrt(jnp.float32(d_in))
    bound2 = 1.0 / jnp.sqrt(jnp.float32(HIDDEN))
    b1 = jax.random.uniform(k3, (HIDDEN,), jnp.float32, -bound1, bound1)
    b2 = jax.random.uniform(k4, (d_out,), jnp.float32, -bound2, bound2)
    return w1, b1, w2, b2


def _reference(x, w1, b1, w2, b2):
    return jnp.maximum(x @ w1 + b1[None, :], 0.0) @ w2 + b2[None, :]


if __name__ == "__main__":
    key = jax.random.PRNGKey(0)
    k_params, k_x1, k_x2 = jax.random.split(key, 3)

    d_in, d_out = 4, 1
    w1, b1, w2, b2 = init_critic_params(k_params, d_in, d_out)

    # Case 1: tiny batch (single grid step).
    x_small = jax.random.normal(k_x1, (8, d_in), dtype=jnp.float32)
    q_small = jax.block_until_ready(critic_net_forward(x_small, w1, b1, w2, b2))
    ref_small = _reference(x_small, w1, b1, w2, b2)
    assert q_small.shape == (8, d_out)
    assert jnp.allclose(q_small, ref_small, atol=1e-5, rtol=1e-5)

    # Case 2: non-multiple batch with a multi-step grid (exercises batch
    # padding, resident weights, and pipelined batch tiles).
    x_big = jax.random.normal(k_x2, (200, d_in), dtype=jnp.float32)
    q_big = jax.block_until_ready(
        critic_net_forward(x_big, w1, b1, w2, b2, tb_max=64))
    ref_big = _reference(x_big, w1, b1, w2, b2)
    assert q_big.shape == (200, d_out)
    assert jnp.allclose(q_big, ref_big, atol=1e-5, rtol=1e-5)

    print("KERNEL_OK")
</pallas_src>

<mosaic_0001>
module attributes {stable_mosaic.version = 11 : i64} {
  func.func @_critic_kernel(%arg0: i32, %arg1: memref<8x4xf32, #tpu.memory_space<vmem>>, %arg2: memref<4x128xf32, #tpu.memory_space<vmem>>, %arg3: memref<1x128xf32, #tpu.memory_space<vmem>>, %arg4: memref<128x128xf32, #tpu.memory_space<vmem>>, %arg5: memref<1x128xf32, #tpu.memory_space<vmem>>, %arg6: memref<8x128xf32, #tpu.memory_space<vmem>>) attributes {dimension_semantics = [#tpu.dimension_semantics<parallel>], iteration_bounds = array<i64: 1>, scalar_prefetch = 0 : i64, scratch_operands = 0 : i64, tpu.core_type = #tpu.core_type<tc>, window_params = [{transform_indices = @transform_0, window_bounds = array<i64: 8, 4>}, {pipeline_mode = #tpu.pipeline_mode<synchronous>, transform_indices = @transform_1, window_bounds = array<i64: 4, 128>}, {pipeline_mode = #tpu.pipeline_mode<synchronous>, transform_indices = @transform_2, window_bounds = array<i64: 1, 128>}, {pipeline_mode = #tpu.pipeline_mode<synchronous>, transform_indices = @transform_3, window_bounds = array<i64: 128, 128>}, {pipeline_mode = #tpu.pipeline_mode<synchronous>, transform_indices = @transform_4, window_bounds = array<i64: 1, 128>}, {transform_indices = @transform_5, window_bounds = array<i64: 8, 128>}]} {
    %c0 = arith.constant 0 : index
    %c0_0 = arith.constant 0 : index
    %0 = vector.load %arg1[%c0, %c0_0] : memref<8x4xf32, #tpu.memory_space<vmem>>, vector<8x4xf32>
    %c0_1 = arith.constant 0 : index
    %c0_2 = arith.constant 0 : index
    %1 = vector.load %arg2[%c0_1, %c0_2] : memref<4x128xf32, #tpu.memory_space<vmem>>, vector<4x128xf32>
    %cst = arith.constant dense<0.000000e+00> : vector<8x128xf32>
    %2 = tpu.matmul %0, %1, %cst {dimension_numbers = #tpu.dot_dimension_numbers<[1], [0], [0], [1], [0, 0, 1, 1], [], []>} : vector<8x4xf32>, vector<4x128xf32>, vector<8x128xf32> -> vector<8x128xf32>
    %c0_3 = arith.constant 0 : index
    %c0_4 = arith.constant 0 : index
    %3 = vector.load %arg3[%c0_3, %c0_4] : memref<1x128xf32, #tpu.memory_space<vmem>>, vector<1x128xf32>
    %4 = vector.broadcast %3 : vector<1x128xf32> to vector<8x128xf32>
    %5 = arith.addf %2, %4 : vector<8x128xf32>
    %cst_5 = arith.constant 0.000000e+00 : f32
    %6 = vector.broadcast %cst_5 : f32 to vector<8x128xf32>
    %7 = arith.maximumf %5, %6 : vector<8x128xf32>
    %c0_6 = arith.constant 0 : index
    %c0_7 = arith.constant 0 : index
    %8 = vector.load %arg4[%c0_6, %c0_7] : memref<128x128xf32, #tpu.memory_space<vmem>>, vector<128x128xf32>
    %cst_8 = arith.constant dense<0.000000e+00> : vector<8x128xf32>
    %9 = tpu.matmul %7, %8, %cst_8 {dimension_numbers = #tpu.dot_dimension_numbers<[1], [0], [0], [1], [0, 0, 1, 1], [], []>} : vector<8x128xf32>, vector<128x128xf32>, vector<8x128xf32> -> vector<8x128xf32>
    %c0_9 = arith.constant 0 : index
    %c0_10 = arith.constant 0 : index
    %10 = vector.load %arg5[%c0_9, %c0_10] : memref<1x128xf32, #tpu.memory_space<vmem>>, vector<1x128xf32>
    %11 = vector.broadcast %10 : vector<1x128xf32> to vector<8x128xf32>
    %12 = arith.addf %9, %11 : vector<8x128xf32>
    %c0_11 = arith.constant 0 : index
    %c0_12 = arith.constant 0 : index
    %13 = vector.load %arg6[%c0_11, %c0_12] : memref<8x128xf32, #tpu.memory_space<vmem>>, vector<8x128xf32>
    tpu.vector_store %arg6[%c0_11, %c0_12], %12 {strides = array<i32>} : memref<8x128xf32, #tpu.memory_space<vmem>>, vector<8x128xf32>,
    return
  }
  func.func @transform_0(%arg0: i32) -> (i32, i32) {
    %c0_i32 = arith.constant 0 : i32
    %c0_i32_0 = arith.constant 0 : i32
    return %arg0, %c0_i32 : i32, i32
  }
  func.func @transform_1(%arg0: i32) -> (i32, i32) {
    %c0_i32 = arith.constant 0 : i32
    %c0_i32_0 = arith.constant 0 : i32
    %c0_i32_1 = arith.constant 0 : i32
    return %c0_i32, %c0_i32_0 : i32, i32
  }
  func.func @transform_2(%arg0: i32) -> (i32, i32) {
    %c0_i32 = arith.constant 0 : i32
    %c0_i32_0 = arith.constant 0 : i32
    %c0_i32_1 = arith.constant 0 : i32
    return %c0_i32, %c0_i32_0 : i32, i32
  }
  func.func @transform_3(%arg0: i32) -> (i32, i32) {
    %c0_i32 = arith.constant 0 : i32
    %c0_i32_0 = arith.constant 0 : i32
    %c0_i32_1 = arith.constant 0 : i32
    return %c0_i32, %c0_i32_0 : i32, i32
  }
  func.func @transform_4(%arg0: i32) -> (i32, i32) {
    %c0_i32 = arith.constant 0 : i32
    %c0_i32_0 = arith.constant 0 : i32
    %c0_i32_1 = arith.constant 0 : i32
    return %c0_i32, %c0_i32_0 : i32, i32
  }
  func.func @transform_5(%arg0: i32) -> (i32, i32) {
    %c0_i32 = arith.constant 0 : i32
    %c0_i32_0 = arith.constant 0 : i32
    return %arg0, %c0_i32 : i32, i32
  }
}

</mosaic_0001>

<llo_original>
// kernel: tpu_custom_call.1
$region0: #{tpu_custom_call.1}
  #allocation0 [shape = 'u32[]', space=smem, size = 0x4, offset = 0x4, fixed_abs, tag = 'smem constant byte address 0x4 - core index']
  #allocation1 [shape = 'u32[72,128]{1,0:T(1,128)}', space=vmem, size = 0x9000, scoped, tag = 'internal scratch']
  %s0 = inlined_call_operand.vmem [shape: f32[8,4], index: 0, kind: input, shape index: {}]
  %s1 = inlined_call_operand.vmem [shape: f32[4,128], index: 1, kind: input, shape index: {}]
  %s2 = inlined_call_operand.vmem [shape: f32[1,128], index: 2, kind: input, shape index: {}]
  %s3 = inlined_call_operand.hbm [shape: f32[128,128], index: 3, kind: input, shape index: {}]
  %s4 = inlined_call_operand.vmem [shape: f32[1,128], index: 4, kind: input, shape index: {}]
  %s5 = inlined_call_operand.hbm [shape: f32[8,128], index: 5, kind: output, shape index: {}]
  %s6 = sld [smem:[#allocation0]]
  $region34: #{tpu_custom_call.1} parent=0
    _
  %s8 = ssub.s32 1, %s6
  %s9 = scalar_select 0, %s8, %s6
  $region1: #{tpu_custom_call.1} parent=0
    #allocation2 [shape = 'u8[65536]{0}', space=vmem, size = 0x10000, scoped, tag = 'input window, operand 3, single buffered']
    #allocation3 [shape = 's32[1]{0}', space=sflag, size = 0x4, scoped, tag = 'scoped memory for tpu_custom_call.1']
    #allocation4 [shape = 's32[1]{0}', space=sflag, size = 0x4, scoped, tag = 'scoped memory for tpu_custom_call.1']
    #allocation5 [shape = 'u8[4096]{0}', space=vmem, size = 0x1000, scoped, tag = 'output window, operand 0, single buffered']
    %10 = vsyncpa [#allocation3], 0
    %11 = vsyncpa [#allocation4], 0
    // Predicated region
    $region2: #{tpu_custom_call.1} parent=1 // pred_check
      _
    $region3: #{tpu_custom_call.1} parent=1 // pred_check_branch
      %13 = sbr.rel (0) target = $region5
    $region4: #{tpu_custom_call.1} parent=1 // pred_region
      _
    $region5: #{tpu_custom_call.1} parent=1 // pred_fallthru
      _
    // Predicated region
    $region6: #{tpu_custom_call.1} parent=1 // pred_check
      _
    $region7: #{tpu_custom_call.1} parent=1 // pred_check_branch
      %15 = sbr.rel (0) target = $region9
    $region8: #{tpu_custom_call.1} parent=1 // pred_region
      _
    $region9: #{tpu_custom_call.1} parent=1 // pred_fallthru
      _
    // Predicated region
    $region10: #{tpu_custom_call.1} parent=1 // pred_check
      _
    $region11: #{tpu_custom_call.1} parent=1 // pred_check_branch
      %17 = sbr.rel (0) target = $region13
    $region12: #{tpu_custom_call.1} parent=1 // pred_region
      _
    $region13: #{tpu_custom_call.1} parent=1 // pred_fallthru
      _
    // Predicated region
    $region14: #{tpu_custom_call.1} parent=1 // pred_check
      _
    $region15: #{tpu_custom_call.1} parent=1 // pred_check_branch
      %19 = sbr.rel (0) target = $region17
    $region16: #{tpu_custom_call.1} parent=1 // pred_region
      %21 = vsyncadd [#allocation3], 0
      %s22 = sshll.u32 %s3, 4
      %s23 = int_to_ptr.hbm [resolvable:$true] %s22
      %s24 = sshll.u32 [#allocation2], 4
      %s25 = int_to_ptr.vmem [resolvable:$true] %s24
      %30 = dma.hbm_to_vmem [thread:$0]  %s23, 2048, %s25, [#allocation3], 128, 128, 8
    $region17: #{tpu_custom_call.1} parent=1 // pred_fallthru
      _
    // Predicated region
    $region18: #{tpu_custom_call.1} parent=1 // pred_check
      _
    $region19: #{tpu_custom_call.1} parent=1 // pred_check_branch
      %32 = sbr.rel (0) target = $region21
    $region20: #{tpu_custom_call.1} parent=1 // pred_region
      _
    $region21: #{tpu_custom_call.1} parent=1 // pred_fallthru
      _
    // Predicated region
    $region22: #{tpu_custom_call.1} parent=1 // pred_check
      _
    $region23: #{tpu_custom_call.1} parent=1 // pred_check_branch
      %34 = sbr.rel (0) target = $region25
    $region24: #{tpu_custom_call.1} parent=1 // pred_region
      %36 = dma.done [#allocation3], 2048
    $region25: #{tpu_custom_call.1} parent=1 // pred_fallthru
      _
    %v37 = vld [vmem:[%s0] sm:$0xff]
    %v38 = vld [vmem:[%s1] sm:$0xf]
    %v39 = vld [vmem:[%s2] sm:$0x1]
    %v41 = vperm.slane %v39, 0
    %vm43 = vcmask 31744
    %v45 = vsel %vm43, %v37, 0
    %vm47 = vcmask 1043456
    %v49 = vsel %vm47, %v38, 0
    %51 = vmatpush.msra.mxu0 0.0
    %52 = vmatpush.msra.mxu0 0.0
    %53 = vmatpush.msra.mxu0 0.0
    %54 = vmatpush.msra.mxu0 0.0
    %55 = vmatpush.msra.mxu0 0.0
    %56 = vmatpush.msra.mxu0 0.0
    %57 = vmatpush.msra.mxu0 0.0
    %58 = vmatpush.msra.mxu0 0.0
    %59 = vmatpush.msra.mxu0 0.0
    %60 = vmatpush.msra.mxu0 0.0
    %61 = vmatpush.msra.mxu0 0.0
    %62 = vmatpush.msra.mxu0 0.0
    %63 = vmatpush.msra.mxu0 0.0
    %64 = vmatpush.msra.mxu0 0.0
    %65 = vmatpush.msra.mxu0 0.0
    %66 = vmatpush.msra.mxu0 %v49
    %67 = vmatmul.f32.gmra.mxu0 %v45
    %v68 = vpop.f32.mrf.mxu0
    %v69 = vadd.f32 %v41, %v68
    %70 = vdwg.mxu0
    %v71 = vmax.f32 %v69, 0.0
    %v72 = vld [vmem:[#allocation2] sm:$0xff]
    %v73 = vld [vmem:[#allocation2 + $0x8] sm:$0xff]
    %v74 = vld [vmem:[#allocation2 + $0x10] sm:$0xff]
    %v75 = vld [vmem:[#allocation2 + $0x18] sm:$0xff]
    %v76 = vld [vmem:[#allocation2 + $0x20] sm:$0xff]
    %v77 = vld [vmem:[#allocation2 + $0x28] sm:$0xff]
    %v78 = vld [vmem:[#allocation2 + $0x30] sm:$0xff]
    %v79 = vld [vmem:[#allocation2 + $0x38] sm:$0xff]
    %v80 = vld [vmem:[#allocation2 + $0x40] sm:$0xff]
    %v81 = vld [vmem:[#allocation2 + $0x48] sm:$0xff]
    %v82 = vld [vmem:[#allocation2 + $0x50] sm:$0xff]
    %v83 = vld [vmem:[#allocation2 + $0x58] sm:$0xff]
    %v84 = vld [vmem:[#allocation2 + $0x60] sm:$0xff]
    %v85 = vld [vmem:[#allocation2 + $0x68] sm:$0xff]
    %v86 = vld [vmem:[#allocation2 + $0x70] sm:$0xff]
    %v87 = vld [vmem:[#allocation2 + $0x78] sm:$0xff]
    %v88 = vld [vmem:[%s4] sm:$0x1]
    %v90 = vperm.slane %v88, 0
    %92 = vmatpush.msra.mxu0 %v87
    %93 = vmatpush.msra.mxu0 %v86
    %94 = vmatpush.msra.mxu0 %v85
    %95 = vmatpush.msra.mxu0 %v84
    %96 = vmatpush.msra.mxu0 %v83
    %97 = vmatpush.msra.mxu0 %v82
    %98 = vmatpush.msra.mxu0 %v81
    %99 = vmatpush.msra.mxu0 %v80
    %100 = vmatpush.msra.mxu0 %v79
    %101 = vmatpush.msra.mxu0 %v78
    %102 = vmatpush.msra.mxu0 %v77
    %103 = vmatpush.msra.mxu0 %v76
    %104 = vmatpush.msra.mxu0 %v75
    %105 = vmatpush.msra.mxu0 %v74
    %106 = vmatpush.msra.mxu0 %v73
    %107 = vmatpush.msra.mxu0 %v72
    %108 = vmatmul.f32.gmra.mxu0 %v71
    %v109 = vpop.f32.mrf.mxu0
    %v110 = vadd.f32 %v90, %v109
    %111 = vdwg.mxu0
    %112 = vst [vmem:[#allocation5] sm:$0xff] %v110
    // Predicated region
    $region26: #{tpu_custom_call.1} parent=1 // pred_check
      _
    $region27: #{tpu_custom_call.1} parent=1 // pred_check_branch
      %114 = sbr.rel (0) target = $region29
    $region28: #{tpu_custom_call.1} parent=1 // pred_region
      %116 = vsyncadd [#allocation4], 0
      %s118 = sshll.u32 [#allocation5], 4
      %s119 = int_to_ptr.vmem [resolvable:$true] %s118
      %s120 = sshll.u32 %s5, 4
      %s121 = int_to_ptr.hbm [resolvable:$true] %s120
      %123 = dma.vmem_to_hbm [thread:$0]  %s119, 128, %s121, [#allocation4]
    $region29: #{tpu_custom_call.1} parent=1 // pred_fallthru
      _
    // Predicated region
    $region30: #{tpu_custom_call.1} parent=1 // pred_check
      _
    $region31: #{tpu_custom_call.1} parent=1 // pred_check_branch
      %125 = sbr.rel (0) target = $region33
    $region32: #{tpu_custom_call.1} parent=1 // pred_region
      %127 = dma.done [#allocation4], 128
    $region33: #{tpu_custom_call.1} parent=1 // pred_fallthru
      _
    %128 = vsyncpa [#allocation3], 1
    %129 = vsyncpa [#allocation4], 1

</llo_original>
